<compile_context>
chip_gen: v6e
topology: v6e:2x2x1
jax: 0.10.0
libtpu: 0.0.40
codegen_flags: <defaults>
</compile_context>

<pallas_src>
import jax
import jax.numpy as jnp
from jax import lax
from jax.experimental import pallas as pl
from jax.experimental.pallas import tpu as pltpu


def _nerf_contrastive_kernel(emb_ref, loss_ref):
    # emb_ref block: (Gt, B, D); loss_ref block: (1, Gt).
    x = emb_ref[...]
    gt, b, d = x.shape

    # All reduction / scaling / transcendental math in f32 (v5e has no bf16
    # VPU/EUP path); only the MXU operands keep the input dtype.
    xf = x.astype(jnp.float32)

    # Row norms: one lane-reduction over D, rsqrt on the EUP. Clamping the
    # squared norm at eps^2 = 1e-16 preserves max(||x||, 1e-8) semantics.
    sq = jnp.sum(xf * xf, axis=-1, keepdims=True)               # (Gt, B, 1)
    inv_norm = lax.rsqrt(jnp.maximum(sq, 1e-16))                # (Gt, B, 1)
    xn = (xf * inv_norm).astype(x.dtype)                        # (Gt, B, D)

    # Batched Gram of the normalized rows = cosine similarities, f32 accum.
    sim = jnp.einsum(
        "gid,gjd->gij", xn, xn, preferred_element_type=jnp.float32
    )                                                           # (Gt, B, B)

    # One (B, B) diagonal mask, broadcast over all Gt slabs. |sim| <= 1
    # (+ fp slack), so the +/-4 shift keeps the diagonal out of both
    # reductions without where-selects or +/-inf constants.
    row = lax.broadcasted_iota(jnp.int32, (b, b), 0)
    col = lax.broadcasted_iota(jnp.int32, (b, b), 1)
    diag_shift = 4.0 * (row == col).astype(jnp.float32)         # (B, B)

    max_v = jnp.max(jnp.max(sim - diag_shift, axis=2), axis=1)  # (Gt,)
    min_v = jnp.min(jnp.min(sim + diag_shift, axis=2), axis=1)  # (Gt,)

    # Same formula as the PyTorch module (no guard for max + min <= 0 or
    # max <= 0: undefined / NaN in the original as well).
    loss = -jnp.log(max_v / (max_v + min_v))                    # (Gt,)
    loss_ref[...] = loss[None, :]                               # lane-dense (1, Gt) store


def _pick_slab_tile(num_slabs):
    # Biggest tile (<= 512 slabs ~= 512 KiB f32 input per step) that divides
    # G while keeping >= 2 grid steps, so v7x's two TensorCores both get
    # work and input/output stay pipelined. Small / indivisible G falls back
    # to a single full-extent step (still legal: full-dim blocks).
    for cand in (512, 384, 256, 128):
        if num_slabs % cand == 0 and num_slabs // cand >= 2:
            return cand
    return num_slabs


def nerf_contrastive_loss_batched(embeddings, slab_tile=None):
    """embeddings: (G, B, D). Returns (G,) float32 losses (one per slab)."""
    g, b, d = embeddings.shape
    if slab_tile is None:
        slab_tile = _pick_slab_tile(g)
    assert g % slab_tile == 0, (g, slab_tile)

    itemsize = jnp.dtype(embeddings.dtype).itemsize
    cost = pl.CostEstimate(
        flops=int(2 * g * b * b * d + 4 * g * b * d + 8 * g * b * b),
        transcendentals=int(g * (b + 1)),       # rsqrt per row + log per slab
        bytes_accessed=int(g * b * d * itemsize + 4 * g),
    )

    out = pl.pallas_call(
        _nerf_contrastive_kernel,
        out_shape=jax.ShapeDtypeStruct((1, g), jnp.float32),
        grid_spec=pltpu.PrefetchScalarGridSpec(
            num_scalar_prefetch=0,
            grid=(g // slab_tile,),
            in_specs=[
                # (Gt, B, D) per step; minor two dims equal the full array
                # dims, so the (8, 128) block rule is satisfied for any B, D.
                pl.BlockSpec((slab_tile, b, d), lambda i: (i, 0, 0)),
            ],
            # Lane-dense output: one (1, Gt) block per step (Gt is a multiple
            # of 128 or the full extent G).
            out_specs=pl.BlockSpec((1, slab_tile), lambda i: (0, i)),
        ),
        compiler_params=pltpu.CompilerParams(
            dimension_semantics=("parallel",),
        ),
        cost_estimate=cost,
    )(embeddings)
    return out[0]


def nerf_contrastive_loss(embeddings):
    """embeddings: (B, D). Returns scalar loss (matches NeRFContrastive.forward)."""
    return nerf_contrastive_loss_batched(embeddings[None])[0]


def _reference_losses(x):
    """Pure-JAX reference mirroring the PyTorch forward, vectorized over slabs."""
    xn = x / jnp.maximum(jnp.linalg.norm(x, axis=-1, keepdims=True), 1e-8)
    sim = jnp.einsum("gid,gjd->gij", xn, xn)
    eye = jnp.eye(x.shape[1], dtype=bool)
    mx = jnp.max(jnp.where(eye, -jnp.inf, sim), axis=(1, 2))
    mn = jnp.min(jnp.where(eye, jnp.inf, sim), axis=(1, 2))
    return -jnp.log(mx / (mx + mn))


if __name__ == "__main__":
    key = jax.random.PRNGKey(0)
    B, D = 8, 32
    G = 256  # batched path: 2 grid steps of 128 slabs each

    # Non-negative embeddings keep off-diagonal cosine similarities positive
    # so the log argument stays in-domain (same regime as the module's use).
    k1, k2 = jax.random.split(key)
    emb_single = jnp.abs(jax.random.normal(k1, (B, D), dtype=jnp.float32)) + 0.1
    emb_batch = jnp.abs(jax.random.normal(k2, (G, B, D), dtype=jnp.float32)) + 0.1

    # Single-instance path (module-equivalent signature).
    loss = nerf_contrastive_loss(emb_single)
    jax.block_until_ready(loss)
    ref = _reference_losses(emb_single[None])[0]
    assert jnp.allclose(loss, ref, rtol=1e-4, atol=1e-5), (loss, ref)

    # Batched path: G independent losses, two lane-dense grid steps.
    losses = nerf_contrastive_loss_batched(emb_batch)
    jax.block_until_ready(losses)
    refs = _reference_losses(emb_batch)
    assert jnp.allclose(losses, refs, rtol=1e-4, atol=1e-5), (losses, refs)

    print("KERNEL_OK")
</pallas_src>

<mosaic_0001>
module attributes {stable_mosaic.version = 11 : i64} {
  func.func @_nerf_contrastive_kernel(%arg0: i32, %arg1: memref<1x8x32xf32, #tpu.memory_space<vmem>>, %arg2: memref<1x1xf32, #tpu.memory_space<vmem>>) attributes {dimension_semantics = [#tpu.dimension_semantics<parallel>], iteration_bounds = array<i64: 1>, scalar_prefetch = 0 : i64, scratch_operands = 0 : i64, tpu.core_type = #tpu.core_type<tc>, window_params = [{transform_indices = @transform_0, window_bounds = array<i64: 1, 8, 32>}, {transform_indices = @transform_1, window_bounds = array<i64: 1, 1>}]} {
    %c0 = arith.constant 0 : index
    %c0_0 = arith.constant 0 : index
    %c0_1 = arith.constant 0 : index
    %0 = vector.load %arg1[%c0, %c0_0, %c0_1] : memref<1x8x32xf32, #tpu.memory_space<vmem>>, vector<1x8x32xf32>
    %1 = arith.mulf %0, %0 : vector<1x8x32xf32>
    %cst = arith.constant dense<0.000000e+00> : vector<1x8xf32>
    %2 = vector.multi_reduction <add>, %1, %cst [2] : vector<1x8x32xf32> to vector<1x8xf32>
    %3 = vector.shape_cast %2 : vector<1x8xf32> to vector<1x8x1xf32>
    %cst_2 = arith.constant 1.000000e-16 : f32
    %4 = vector.broadcast %cst_2 : f32 to vector<1x8x1xf32>
    %5 = arith.maximumf %3, %4 : vector<1x8x1xf32>
    %6 = math.rsqrt %5 : vector<1x8x1xf32>
    %7 = vector.broadcast %6 : vector<1x8x1xf32> to vector<1x8x32xf32>
    %8 = arith.mulf %0, %7 : vector<1x8x32xf32>
    "tpu.trace_start"() <{level = 10 : i32, message = "gid,gjd->gij"}> : () -> ()
    %cst_3 = arith.constant dense<0.000000e+00> : vector<1x8x8xf32>
    %9 = tpu.matmul %8, %8, %cst_3 {dimension_numbers = #tpu.dot_dimension_numbers<[2], [2], [1], [1], [0, 0, 0, 1, 1, 1], [0], [0]>} : vector<1x8x32xf32>, vector<1x8x32xf32>, vector<1x8x8xf32> -> vector<1x8x8xf32>
    "tpu.trace_stop"() : () -> ()
    %10 = tpu.iota {dimensions = array<i32: 0>} : vector<8x8xi32>
    %11 = tpu.iota {dimensions = array<i32: 1>} : vector<8x8xi32>
    %12 = arith.cmpi eq, %10, %11 : vector<8x8xi32>
    %13 = arith.extui %12 : vector<8x8xi1> to vector<8x8xi32>
    %14 = arith.sitofp %13 : vector<8x8xi32> to vector<8x8xf32>
    %cst_4 = arith.constant 4.000000e+00 : f32
    %15 = vector.broadcast %cst_4 : f32 to vector<8x8xf32>
    %16 = arith.mulf %15, %14 : vector<8x8xf32>
    %17 = vector.shape_cast %16 : vector<8x8xf32> to vector<1x8x8xf32>
    %18 = arith.subf %9, %17 : vector<1x8x8xf32>
    %cst_5 = arith.constant dense<0xFF800000> : vector<1x8xf32>
    %19 = vector.multi_reduction <maximumf>, %18, %cst_5 [2] : vector<1x8x8xf32> to vector<1x8xf32>
    %cst_6 = arith.constant dense<0xFF800000> : vector<1xf32>
    %20 = vector.multi_reduction <maximumf>, %19, %cst_6 [1] : vector<1x8xf32> to vector<1xf32>
    %21 = vector.shape_cast %16 : vector<8x8xf32> to vector<1x8x8xf32>
    %22 = arith.addf %9, %21 : vector<1x8x8xf32>
    %cst_7 = arith.constant dense<0x7F800000> : vector<1x8xf32>
    %23 = vector.multi_reduction <minimumf>, %22, %cst_7 [2] : vector<1x8x8xf32> to vector<1x8xf32>
    %cst_8 = arith.constant dense<0x7F800000> : vector<1xf32>
    %24 = vector.multi_reduction <minimumf>, %23, %cst_8 [1] : vector<1x8xf32> to vector<1xf32>
    %25 = arith.addf %20, %24 : vector<1xf32>
    %26 = arith.divf %20, %25 : vector<1xf32>
    %27 = math.log %26 : vector<1xf32>
    %cst_9 = arith.constant 0.000000e+00 : f32
    %28 = vector.broadcast %cst_9 : f32 to vector<1xf32>
    %29 = arith.subf %28, %27 : vector<1xf32>
    %30 = vector.shape_cast %29 : vector<1xf32> to vector<1x1xf32>
    %c0_10 = arith.constant 0 : index
    %c0_11 = arith.constant 0 : index
    %31 = vector.load %arg2[%c0_10, %c0_11] : memref<1x1xf32, #tpu.memory_space<vmem>>, vector<1x1xf32>
    tpu.vector_store %arg2[%c0_10, %c0_11], %30 {strides = array<i32>} : memref<1x1xf32, #tpu.memory_space<vmem>>, vector<1x1xf32>,
    return
  }
  func.func @transform_0(%arg0: i32) -> (i32, i32, i32) {
    %c0_i32 = arith.constant 0 : i32
    %c0_i32_0 = arith.constant 0 : i32
    %c0_i32_1 = arith.constant 0 : i32
    return %arg0, %c0_i32, %c0_i32_0 : i32, i32, i32
  }
  func.func @transform_1(%arg0: i32) -> (i32, i32) {
    %c0_i32 = arith.constant 0 : i32
    %c0_i32_0 = arith.constant 0 : i32
    return %c0_i32, %arg0 : i32, i32
  }
}

</mosaic_0001>

<llo_original>
// kernel: tpu_custom_call.1
$region0: #{tpu_custom_call.1}
  #allocation0 [shape = 'u32[]', space=smem, size = 0x4, offset = 0x4, fixed_abs, tag = 'smem constant byte address 0x4 - core index']
  #allocation1 [shape = 'u32[144,128]{1,0:T(1,128)}', space=vmem, size = 0x12000, scoped, tag = 'internal scratch']
  %s0 = inlined_call_operand.hbm [shape: f32[1,8,32], index: 0, kind: input, shape index: {}]
  %s1 = inlined_call_operand.hbm [shape: f32[1,1], index: 1, kind: output, shape index: {}]
  %s2 = sld [smem:[#allocation0]]
  $region18: #{tpu_custom_call.1} parent=0
    _
  %s4 = ssub.s32 1, %s2
  %s5 = scalar_select 0, %s4, %s2
  $region1: #{tpu_custom_call.1} parent=0
    #allocation2 [shape = 'u8[4096]{0}', space=vmem, size = 0x1000, scoped, tag = 'input window, operand 0, single buffered']
    #allocation3 [shape = 's32[1]{0}', space=sflag, size = 0x4, scoped, tag = 'scoped memory for tpu_custom_call.1']
    #allocation4 [shape = 's32[1]{0}', space=sflag, size = 0x4, scoped, tag = 'scoped memory for tpu_custom_call.1']
    #allocation5 [shape = 'u8[512]{0}', space=vmem, size = 0x400, scoped, tag = 'output window, operand 0, single buffered']
    %6 = vsyncpa [#allocation3], 0
    %7 = vsyncpa [#allocation4], 0
    // Predicated region
    $region2: #{tpu_custom_call.1} parent=1 // pred_check
      _
    $region3: #{tpu_custom_call.1} parent=1 // pred_check_branch
      %9 = sbr.rel (0) target = $region5
    $region4: #{tpu_custom_call.1} parent=1 // pred_region
      %s11 = ssub.s32 128, 128
      %12 = vsyncadd [#allocation3], %s11
      %s14 = sshll.u32 [#allocation2], 4
      %s15 = int_to_ptr.vmem [resolvable:$true] %s14
      %17 = dma.hbm_to_vmem [thread:$0]  %s0, 128, %s15, [#allocation3]
    $region5: #{tpu_custom_call.1} parent=1 // pred_fallthru
      _
    // Predicated region
    $region6: #{tpu_custom_call.1} parent=1 // pred_check
      _
    $region7: #{tpu_custom_call.1} parent=1 // pred_check_branch
      %19 = sbr.rel (0) target = $region9
    $region8: #{tpu_custom_call.1} parent=1 // pred_region
      %20 = dma.done [#allocation3], 128
    $region9: #{tpu_custom_call.1} parent=1 // pred_fallthru
      _
    %v21 = vld [vmem:[#allocation2] sm:$0xff]
    %v22 = vmul.f32 %v21, %v21
    %vm23 = vcmask 261120
    %v24 = vsel %vm23, %v22, 0.0
    %25 = vadd.xlane.f32.xlu0 %v24
    %v26 = vpop.xlane.xlu0 %25
    %v27 = vmax.f32 %v26, 1e-16
    %v28 = vrsqrt.pop %v27
    %v29 = vmul.f32 %v21, %v28
    %v31 = vsel %vm23, %v29, 0
    %33 = vmatprep.subr.mxu0 0.0
    %34 = vmatpush1.xpose.msra.mxu0 0.0
    %35 = vmatprep.subr.mxu0 0.0
    %36 = vmatpush1.xpose.msra.mxu0 0.0
    %37 = vmatprep.subr.mxu0 0.0
    %38 = vmatpush1.xpose.msra.mxu0 0.0
    %39 = vmatprep.subr.mxu0 0.0
    %40 = vmatpush1.xpose.msra.mxu0 0.0
    %41 = vmatprep.subr.mxu0 0.0
    %42 = vmatpush1.xpose.msra.mxu0 0.0
    %43 = vmatprep.subr.mxu0 0.0
    %44 = vmatpush1.xpose.msra.mxu0 0.0
    %45 = vmatprep.subr.mxu0 0.0
    %46 = vmatpush1.xpose.msra.mxu0 0.0
    %47 = vmatprep.subr.mxu0 0.0
    %48 = vmatpush1.xpose.msra.mxu0 0.0
    %49 = vmatprep.subr.mxu0 0.0
    %50 = vmatpush1.xpose.msra.mxu0 0.0
    %51 = vmatprep.subr.mxu0 0.0
    %52 = vmatpush1.xpose.msra.mxu0 0.0
    %53 = vmatprep.subr.mxu0 0.0
    %54 = vmatpush1.xpose.msra.mxu0 0.0
    %55 = vmatprep.subr.mxu0 0.0
    %56 = vmatpush1.xpose.msra.mxu0 0.0
    %57 = vmatprep.subr.mxu0 0.0
    %58 = vmatpush1.xpose.msra.mxu0 0.0
    %59 = vmatprep.subr.mxu0 0.0
    %60 = vmatpush1.xpose.msra.mxu0 0.0
    %61 = vmatprep.subr.mxu0 0.0
    %62 = vmatpush1.xpose.msra.mxu0 0.0
    %63 = vmatprep.subr.mxu0 0.0
    %64 = vmatpush1.xpose.msra.mxu0 %v31
    %65 = vmatprep.subr.mxu0 0.0
    %66 = vmatpush2.xpose.msra.mxu0 0.0
    %67 = vmatprep.subr.mxu0 0.0
    %68 = vmatpush2.xpose.msra.mxu0 0.0
    %69 = vmatprep.subr.mxu0 0.0
    %70 = vmatpush2.xpose.msra.mxu0 0.0
    %71 = vmatprep.subr.mxu0 0.0
    %72 = vmatpush2.xpose.msra.mxu0 0.0
    %73 = vmatprep.subr.mxu0 0.0
    %74 = vmatpush2.xpose.msra.mxu0 0.0
    %75 = vmatprep.subr.mxu0 0.0
    %76 = vmatpush2.xpose.msra.mxu0 0.0
    %77 = vmatprep.subr.mxu0 0.0
    %78 = vmatpush2.xpose.msra.mxu0 0.0
    %79 = vmatprep.subr.mxu0 0.0
    %80 = vmatpush2.xpose.msra.mxu0 0.0
    %81 = vmatprep.subr.mxu0 0.0
    %82 = vmatpush2.xpose.msra.mxu0 0.0
    %83 = vmatprep.subr.mxu0 0.0
    %84 = vmatpush2.xpose.msra.mxu0 0.0
    %85 = vmatprep.subr.mxu0 0.0
    %86 = vmatpush2.xpose.msra.mxu0 0.0
    %87 = vmatprep.subr.mxu0 0.0
    %88 = vmatpush2.xpose.msra.mxu0 0.0
    %89 = vmatprep.subr.mxu0 0.0
    %90 = vmatpush2.xpose.msra.mxu0 0.0
    %91 = vmatprep.subr.mxu0 0.0
    %92 = vmatpush2.xpose.msra.mxu0 0.0
    %93 = vmatprep.subr.mxu0 0.0
    %94 = vmatpush2.xpose.msra.mxu0 0.0
    %95 = vmatprep.subr.mxu0 0.0
    %96 = vmatpush2.xpose.msra.mxu0 0.0
    %97 = vmatprep.mubr.f32.mxu0 0.0
    %98 = vmatmul.mubr.f32.gmra.mxu0 %v31
    %v99 = vpop.f32.mrf.mxu0
    %v100 = vadd.f32 0.0, %v99
    %v101 = vpop.f32.mrf.mxu0
    %102 = vdwg.mxu0
    %v103 = vlaneseq
    %v104 = vshrl.u32 %v103, 7
    %v105 = vlaneseq
    %v106 = vand.u32 %v105, 127
    %vm107 = vcmp.eq.s32.totalorder %v104, %v106
    %v108 = vsel %vm107, 1, 0
    %v109 = vcvt.s32.f32 %v108
    %v110 = vmul.f32 %v109, 4.0
    %v111 = vsub.f32 %v100, %v110
    %vm112 = vcmask 64512
    %v113 = vsel %vm112, %v111, -inf
    %114 = vmax.xlane.f32.xlu0 %v113
    %v115 = vpop.xlane.xlu0 %114
    %v116 = vrot.slane %v115, 4
    %v117 = vmax.f32 %v115, %v116
    %v118 = vrot.slane %v117, 2
    %v119 = vmax.f32 %v117, %v118
    %v120 = vrot.slane %v119, 1
    %v121 = vmax.f32 %v119, %v120
    %v122 = vadd.f32 %v100, %v110
    %v123 = vsel %vm112, %v122, inf
    %124 = vmin.xlane.f32.xlu0 %v123
    %v125 = vpop.xlane.xlu0 %124
    %v126 = vrot.slane %v125, 4
    %v127 = vmin.f32 %v125, %v126
    %v128 = vrot.slane %v127, 2
    %v129 = vmin.f32 %v127, %v128
    %v130 = vrot.slane %v129, 1
    %v131 = vmin.f32 %v129, %v130
    %v132 = vadd.f32 %v121, %v131
    %v133 = vrcp.pop %v132
    %v134 = vmul.f32 %v121, %v133
    %v135 = vlog2.pop %v134
    %v136 = vmul.f32 %v135, 0.6931472
    %v137 = vsub.f32 0.0, %v136
    %vm138 = vcmask 0
    %139 = vst.msk [vmem:[#allocation5] sm:$0x1] %vm138, %v137
    // Predicated region
    $region10: #{tpu_custom_call.1} parent=1 // pred_check
      _
    $region11: #{tpu_custom_call.1} parent=1 // pred_check_branch
      %141 = sbr.rel (0) target = $region13
    $region12: #{tpu_custom_call.1} parent=1 // pred_region
      %s143 = ssub.s32 16, 16
      %144 = vsyncadd [#allocation4], %s143
      %s146 = sshll.u32 [#allocation5], 4
      %s147 = int_to_ptr.vmem [resolvable:$true] %s146
      %149 = dma.vmem_to_hbm [thread:$0]  %s147, 16, %s1, [#allocation4]
    $region13: #{tpu_custom_call.1} parent=1 // pred_fallthru
      _
    // Predicated region
    $region14: #{tpu_custom_call.1} parent=1 // pred_check
      _
    $region15: #{tpu_custom_call.1} parent=1 // pred_check_branch
      %151 = sbr.rel (0) target = $region17
    $region16: #{tpu_custom_call.1} parent=1 // pred_region
      %152 = dma.done [#allocation4], 16
    $region17: #{tpu_custom_call.1} parent=1 // pred_fallthru
      _
    %153 = vsyncpa [#allocation3], 1
    %154 = vsyncpa [#allocation4], 1

</llo_original>
